<compile_context>
chip_gen: v7x
topology: tpu7x:2x2x1
jax: 0.10.0
libtpu: 0.0.40
codegen_flags: <defaults>
</compile_context>

<pallas_src>
import functools

import jax
import jax.numpy as jnp
from jax.experimental import pallas as pl
from jax.experimental.pallas import tpu as pltpu


def _spec(block_shape, index_map, buffers=None):
    """BlockSpec helper: request an explicit pipeline buffer count if supported."""
    if buffers is not None and hasattr(pl, "Buffered"):
        try:
            return pl.BlockSpec(block_shape, index_map,
                                pipeline_mode=pl.Buffered(buffers))
        except TypeError:  # older BlockSpec without pipeline_mode kwarg
            pass
    return pl.BlockSpec(block_shape, index_map)


def _sublayer_connection_kernel(x_ref, w_ref, b_ref, o_ref, normed_ref,
                                *, feat, eps, tn, num_n):
    n = pl.program_id(1)

    # LayerNorm runs once per token tile; its bf16 result feeds every N slab.
    @pl.when(n == 0)
    def _():
        x = x_ref[...].astype(jnp.float32)                     # (TM, D)
        # Independent reductions (sum, sum-of-squares) -> overlapping XLU work.
        s1 = jnp.sum(x, axis=-1, keepdims=True)
        s2 = jnp.sum(x * x, axis=-1, keepdims=True)
        mean = s1 * (1.0 / feat)
        # torch std(): unbiased variance, eps added to std (not to variance).
        var = (s2 - feat * (mean * mean)) * (1.0 / (feat - 1))
        std = jnp.sqrt(jnp.maximum(var, 0.0))
        inv_std = pl.reciprocal(std + eps, approx=True)        # EUP slot
        normed_ref[...] = ((x - mean) * inv_std).astype(normed_ref.dtype)

    # Sublayer: Linear slab on the MXU, bf16 feed / f32 accumulation.
    # (a_2 / b_2 already folded into w_ref / b_ref on the host.)
    sub = jnp.dot(normed_ref[...], w_ref[...],
                  preferred_element_type=jnp.float32)          # (TM, TN)
    sub = sub + b_ref[...]

    # Residual add (dropout is identity in eval mode).
    # TODO(synk): training-mode dropout (pltpu.prng_seed + stateful_bernoulli)
    # not emitted; eval semantics only.
    if num_n == 1:
        x_res = x_ref[...].astype(jnp.float32)
    else:
        col = pl.multiple_of(n * tn, 128)
        x_res = x_ref[:, pl.ds(col, tn)].astype(jnp.float32)
    o_ref[...] = (x_res + sub).astype(o_ref.dtype)


def sublayer_connection(x, a_2, b_2, w, w_b, *, eps=1e-6, block_rows=None):
    """Fused pre-norm residual block:  out = x + Linear(LayerNorm(x)).

    x: (..., D) float32; a_2/b_2/w_b: (D,); w: (D, D).
    """
    orig_shape = x.shape
    D = orig_shape[-1]
    x2d = x.reshape(-1, D)
    M = x2d.shape[0]

    # --- fold the LayerNorm affine into the linear layer (host-side, free) ---
    a2 = a_2.astype(jnp.float32)
    b2 = b_2.astype(jnp.float32)
    w_f32 = w.astype(jnp.float32)
    w_folded = (a2[:, None] * w_f32).astype(jnp.bfloat16)        # (D, D) bf16
    bias_folded = (b2 @ w_f32 + w_b.astype(jnp.float32)).reshape(1, D)

    # --- per-core VMEM capacity with headroom (v5e/v6e: 128 MiB, v7x: 64 MiB) ---
    try:
        vmem_cap = int(pltpu.get_tpu_info().vmem_capacity_bytes)
    except Exception:
        vmem_cap = 64 << 20            # conservative fallback (v7x per-TC size)
    vmem_ceiling = int(0.8 * vmem_cap)

    # --- N (output-feature) slab size: keep the bf16 weight slab modest ---
    weight_budget = max(vmem_cap // 4, 4 << 20)
    tn = D
    if D % 128 == 0 and D * D * 2 > weight_budget:
        tn = 128
        for cand in (4096, 2048, 1024, 512, 256):
            if D % cand == 0 and D * cand * 2 * 2 <= weight_budget:
                tn = cand
                break
    num_n = D // tn

    # --- token tile: large for small D (HBM-bound), 16-aligned for bf16/MXU ---
    if block_rows is None:
        block_rows = 1024 if D <= 512 else 512
    tm = min(block_rows, max(M, 16))
    tm = ((tm + 15) // 16) * 16
    # Keep >= 2 token tiles when possible (v7x: two TensorCores share the
    # "parallel" axis) without dropping below the 16-row bf16 pack.
    if pl.cdiv(M, tm) == 1 and M >= 32:
        tm = ((pl.cdiv(M, 2) + 15) // 16) * 16

    def _need(tm_):
        return (2 * tm_ * D * 4                              # x tiles (dbl-buf)
                + (1 if num_n == 1 else 2) * D * tn * 2      # weight slab(s)
                + (1 if num_n == 1 else 2) * tn * 4          # folded bias
                + 2 * tm_ * tn * 4                           # out tiles (dbl-buf)
                + tm_ * D * 2)                               # normed bf16 scratch

    while _need(tm) > vmem_ceiling and tm > 16:
        tm = max(16, ((tm // 2 + 15) // 16) * 16)

    m_pad = pl.cdiv(M, tm) * tm
    if m_pad != M:
        x2d = jnp.pad(x2d, ((0, m_pad - M), (0, 0)))
    num_m = m_pad // tm

    need = _need(tm)
    vmem_limit = min(vmem_ceiling, max(int(1.3 * need) + (2 << 20), 16 << 20))

    # Weight traffic: fetched once if grid-invariant, else re-streamed per token tile.
    w_traffic = D * D * 2 if num_n == 1 else num_m * D * D * 2
    cost = pl.CostEstimate(
        flops=2 * m_pad * D * D + 8 * m_pad * D,
        transcendentals=2 * m_pad,
        bytes_accessed=2 * m_pad * D * 4 + w_traffic + D * 4,
    )

    kernel = functools.partial(_sublayer_connection_kernel,
                               feat=D, eps=eps, tn=tn, num_n=num_n)
    inv_buf = 1 if num_n == 1 else None   # grid-invariant operands -> single buffer

    out2d = pl.pallas_call(
        kernel,
        out_shape=jax.ShapeDtypeStruct((m_pad, D), x.dtype),
        grid_spec=pltpu.PrefetchScalarGridSpec(
            num_scalar_prefetch=0,
            grid=(num_m, num_n),
            in_specs=[
                # TODO(synk): on v5e, bump x to pl.Buffered(3) if DMA is still exposed.
                _spec((tm, D), lambda i, n: (i, 0)),                  # x (streamed per i)
                _spec((D, tn), lambda i, n: (0, n), buffers=inv_buf),  # folded weight
                _spec((1, tn), lambda i, n: (0, n), buffers=inv_buf),  # folded bias
            ],
            out_specs=pl.BlockSpec((tm, tn), lambda i, n: (i, n)),
            scratch_shapes=[pltpu.VMEM((tm, D), jnp.bfloat16)],        # normed stash
        ),
        compiler_params=pltpu.CompilerParams(
            dimension_semantics=("parallel", "arbitrary"),
            vmem_limit_bytes=vmem_limit,
        ),
        cost_estimate=cost,
    )(x2d, w_folded, bias_folded)

    return out2d[:M].reshape(orig_shape)


def _reference(x, a_2, b_2, w, w_b, eps=1e-6):
    mean = jnp.mean(x, axis=-1, keepdims=True)
    std = jnp.sqrt(
        jnp.sum((x - mean) ** 2, axis=-1, keepdims=True) / (x.shape[-1] - 1))
    normed = a_2 * (x - mean) / (std + eps) + b_2
    sub = normed @ w + w_b
    return x + sub


if __name__ == "__main__":
    key = jax.random.PRNGKey(0)
    # Lane-dense hidden (multiple of 128) so stores are full-width vst.
    batch, seq, hidden = 2, 8, 128

    kx, kw, kb, ka, kbb = jax.random.split(key, 5)
    x = jax.random.normal(kx, (batch, seq, hidden), dtype=jnp.float32)

    # Non-trivial LayerNorm affine so the host-side weight folding is exercised.
    a_2 = 1.0 + 0.1 * jax.random.normal(ka, (hidden,), dtype=jnp.float32)
    b_2 = 0.1 * jax.random.normal(kbb, (hidden,), dtype=jnp.float32)
    w = jax.random.normal(kw, (hidden, hidden), dtype=jnp.float32) * 0.02
    w_b = jax.random.normal(kb, (hidden,), dtype=jnp.float32) * 0.02

    out = sublayer_connection(x, a_2, b_2, w, w_b)
    out = jax.block_until_ready(out)

    ref = _reference(x, a_2, b_2, w, w_b)
    assert out.shape == x.shape and out.dtype == x.dtype
    # bf16 MXU feed (with folded affine) + approx reciprocal => relaxed tolerance.
    assert jnp.allclose(out, ref, atol=2e-2, rtol=2e-2), "mismatch vs reference"

    print("KERNEL_OK")
</pallas_src>

<mosaic_0001>
module attributes {stable_mosaic.version = 11 : i64} {
  func.func @_sublayer_connection_kernel(%arg0: i32, %arg1: i32, %arg2: memref<16x128xf32, #tpu.memory_space<vmem>>, %arg3: memref<128x128xbf16, #tpu.memory_space<vmem>>, %arg4: memref<1x128xf32, #tpu.memory_space<vmem>>, %arg5: memref<16x128xf32, #tpu.memory_space<vmem>>, %arg6: memref<16x128xbf16, #tpu.memory_space<vmem>>) attributes {dimension_semantics = [#tpu.dimension_semantics<parallel>, #tpu.dimension_semantics<arbitrary>], iteration_bounds = array<i64: 1, 1>, scalar_prefetch = 0 : i64, scratch_operands = 1 : i64, tpu.core_type = #tpu.core_type<tc>, window_params = [{transform_indices = @transform_0, window_bounds = array<i64: 16, 128>}, {pipeline_mode = #tpu.pipeline_mode<synchronous>, transform_indices = @transform_1, window_bounds = array<i64: 128, 128>}, {pipeline_mode = #tpu.pipeline_mode<synchronous>, transform_indices = @transform_2, window_bounds = array<i64: 1, 128>}, {transform_indices = @transform_3, window_bounds = array<i64: 16, 128>}]} {
    %c0_i32 = arith.constant 0 : i32
    %0 = arith.cmpi eq, %arg1, %c0_i32 : i32
    %1 = arith.extui %0 : i1 to i32
    %c0_i32_0 = arith.constant 0 : i32
    %2 = arith.cmpi ne, %1, %c0_i32_0 : i32
    scf.if %2 {
      %c0_10 = arith.constant 0 : index
      %c0_11 = arith.constant 0 : index
      %12 = vector.load %arg2[%c0_10, %c0_11] : memref<16x128xf32, #tpu.memory_space<vmem>>, vector<16x128xf32>
      %cst_12 = arith.constant dense<0.000000e+00> : vector<16xf32>
      %13 = vector.multi_reduction <add>, %12, %cst_12 [1] : vector<16x128xf32> to vector<16xf32>
      %14 = vector.shape_cast %13 : vector<16xf32> to vector<16x1xf32>
      %15 = arith.mulf %12, %12 : vector<16x128xf32>
      %cst_13 = arith.constant dense<0.000000e+00> : vector<16xf32>
      %16 = vector.multi_reduction <add>, %15, %cst_13 [1] : vector<16x128xf32> to vector<16xf32>
      %17 = vector.shape_cast %16 : vector<16xf32> to vector<16x1xf32>
      %cst_14 = arith.constant 7.812500e-03 : f32
      %18 = vector.broadcast %cst_14 : f32 to vector<16x1xf32>
      %19 = arith.mulf %14, %18 : vector<16x1xf32>
      %20 = arith.mulf %19, %19 : vector<16x1xf32>
      %cst_15 = arith.constant 1.280000e+02 : f32
      %21 = vector.broadcast %cst_15 : f32 to vector<16x1xf32>
      %22 = arith.mulf %21, %20 : vector<16x1xf32>
      %23 = arith.subf %17, %22 : vector<16x1xf32>
      %cst_16 = arith.constant 0.00787401571 : f32
      %24 = vector.broadcast %cst_16 : f32 to vector<16x1xf32>
      %25 = arith.mulf %23, %24 : vector<16x1xf32>
      %cst_17 = arith.constant 0.000000e+00 : f32
      %26 = vector.broadcast %cst_17 : f32 to vector<16x1xf32>
      %27 = arith.maximumf %25, %26 : vector<16x1xf32>
      %28 = math.sqrt %27 : vector<16x1xf32>
      %cst_18 = arith.constant 9.99999997E-7 : f32
      %29 = vector.broadcast %cst_18 : f32 to vector<16x1xf32>
      %30 = arith.addf %28, %29 : vector<16x1xf32>
      %31 = tpu.reciprocal %30 {approx = true} : vector<16x1xf32> -> vector<16x1xf32>
      %32 = vector.broadcast %19 : vector<16x1xf32> to vector<16x128xf32>
      %33 = arith.subf %12, %32 : vector<16x128xf32>
      %34 = vector.broadcast %31 : vector<16x1xf32> to vector<16x128xf32>
      %35 = arith.mulf %33, %34 : vector<16x128xf32>
      %36 = arith.truncf %35 : vector<16x128xf32> to vector<16x128xbf16>
      %c0_19 = arith.constant 0 : index
      %c0_20 = arith.constant 0 : index
      %37 = vector.load %arg6[%c0_19, %c0_20] : memref<16x128xbf16, #tpu.memory_space<vmem>>, vector<16x128xbf16>
      tpu.vector_store %arg6[%c0_19, %c0_20], %36 {strides = array<i32>} : memref<16x128xbf16, #tpu.memory_space<vmem>>, vector<16x128xbf16>,
    } else {
    }
    %c0 = arith.constant 0 : index
    %c0_1 = arith.constant 0 : index
    %3 = vector.load %arg6[%c0, %c0_1] : memref<16x128xbf16, #tpu.memory_space<vmem>>, vector<16x128xbf16>
    %c0_2 = arith.constant 0 : index
    %c0_3 = arith.constant 0 : index
    %4 = vector.load %arg3[%c0_2, %c0_3] : memref<128x128xbf16, #tpu.memory_space<vmem>>, vector<128x128xbf16>
    %cst = arith.constant dense<0.000000e+00> : vector<16x128xf32>
    %5 = tpu.matmul %3, %4, %cst {dimension_numbers = #tpu.dot_dimension_numbers<[1], [0], [0], [1], [0, 0, 1, 1], [], []>} : vector<16x128xbf16>, vector<128x128xbf16>, vector<16x128xf32> -> vector<16x128xf32>
    %c0_4 = arith.constant 0 : index
    %c0_5 = arith.constant 0 : index
    %6 = vector.load %arg4[%c0_4, %c0_5] : memref<1x128xf32, #tpu.memory_space<vmem>>, vector<1x128xf32>
    %7 = vector.broadcast %6 : vector<1x128xf32> to vector<16x128xf32>
    %8 = arith.addf %5, %7 : vector<16x128xf32>
    %c0_6 = arith.constant 0 : index
    %c0_7 = arith.constant 0 : index
    %9 = vector.load %arg2[%c0_6, %c0_7] : memref<16x128xf32, #tpu.memory_space<vmem>>, vector<16x128xf32>
    %10 = arith.addf %9, %8 : vector<16x128xf32>
    %c0_8 = arith.constant 0 : index
    %c0_9 = arith.constant 0 : index
    %11 = vector.load %arg5[%c0_8, %c0_9] : memref<16x128xf32, #tpu.memory_space<vmem>>, vector<16x128xf32>
    tpu.vector_store %arg5[%c0_8, %c0_9], %10 {strides = array<i32>} : memref<16x128xf32, #tpu.memory_space<vmem>>, vector<16x128xf32>,
    return
  }
  func.func @transform_0(%arg0: i32, %arg1: i32) -> (i32, i32) {
    %c0_i32 = arith.constant 0 : i32
    %c0_i32_0 = arith.constant 0 : i32
    return %arg0, %c0_i32 : i32, i32
  }
  func.func @transform_1(%arg0: i32, %arg1: i32) -> (i32, i32) {
    %c0_i32 = arith.constant 0 : i32
    %c0_i32_0 = arith.constant 0 : i32
    return %c0_i32, %arg1 : i32, i32
  }
  func.func @transform_2(%arg0: i32, %arg1: i32) -> (i32, i32) {
    %c0_i32 = arith.constant 0 : i32
    %c0_i32_0 = arith.constant 0 : i32
    return %c0_i32, %arg1 : i32, i32
  }
  func.func @transform_3(%arg0: i32, %arg1: i32) -> (i32, i32) {
    %c0_i32 = arith.constant 0 : i32
    return %arg0, %arg1 : i32, i32
  }
}

</mosaic_0001>

<llo_original>
// kernel: tpu_custom_call.1
$region0: #{tpu_custom_call.1}
  #allocation0 [shape = 'u32[]', space=smem, size = 0x4, offset = 0x4, fixed_abs, tag = 'smem constant byte address 0x4 - core index']
  #allocation1 [shape = 'u32[144,128]{1,0:T(1,128)}', space=vmem, size = 0x12000, scoped, tag = 'internal scratch']
  #allocation2 [shape = 'bf16[16,128]{1,0:T(16,128)(2,1)}', space=vmem, size = 0x1000, scoped, tag = 'scratch operand']
  %s0 = inlined_call_operand.hbm [shape: f32[16,128], index: 0, kind: input, shape index: {}]
  %s1 = inlined_call_operand.hbm [shape: bf16[128,128], index: 1, kind: input, shape index: {}]
  %s2 = inlined_call_operand.vmem [shape: f32[1,128], index: 2, kind: input, shape index: {}]
  %s3 = inlined_call_operand.hbm [shape: f32[16,128], index: 3, kind: output, shape index: {}]
  %s4 = sld [smem:[#allocation0]]
  $region34: #{tpu_custom_call.1} parent=0
    _
  %s6 = ssub.s32 1, %s4
  %s7 = scalar_select 0, %s6, %s4
  $region1: #{tpu_custom_call.1} parent=0
    #allocation3 [shape = 'u8[8192]{0}', space=vmem, size = 0x2000, scoped, tag = 'input window, operand 0, single buffered']
    #allocation4 [shape = 's32[1]{0}', space=sflag, size = 0x4, scoped, tag = 'scoped memory for tpu_custom_call.1']
    #allocation5 [shape = 's32[1]{0}', space=sflag, size = 0x4, scoped, tag = 'scoped memory for tpu_custom_call.1']
    #allocation6 [shape = 'u8[32768]{0}', space=vmem, size = 0x8000, scoped, tag = 'input window, operand 1, single buffered']
    #allocation7 [shape = 's32[1]{0}', space=sflag, size = 0x4, scoped, tag = 'scoped memory for tpu_custom_call.1']
    #allocation8 [shape = 'u8[8192]{0}', space=vmem, size = 0x2000, scoped, tag = 'output window, operand 0, single buffered']
    %8 = vsyncpa [#allocation4], 0
    %9 = vsyncpa [#allocation7], 0
    %10 = vsyncpa [#allocation5], 0
    // Predicated region
    $region2: #{tpu_custom_call.1} parent=1 // pred_check
      _
    $region3: #{tpu_custom_call.1} parent=1 // pred_check_branch
      %12 = sbr.rel (0) target = $region5
    $region4: #{tpu_custom_call.1} parent=1 // pred_region
      %s14 = ssub.s32 256, 256
      %15 = vsyncadd [#allocation4], %s14
      %s16 = sshll.u32 [#allocation3], 4
      %s17 = int_to_ptr.vmem [resolvable:$true] %s16
      %22 = dma.hbm_to_vmem [thread:$0]  %s0, 256, %s17, [#allocation4], 128, 128, 8
    $region5: #{tpu_custom_call.1} parent=1 // pred_fallthru
      _
    // Predicated region
    $region6: #{tpu_custom_call.1} parent=1 // pred_check
      _
    $region7: #{tpu_custom_call.1} parent=1 // pred_check_branch
      %24 = sbr.rel (0) target = $region9
    $region8: #{tpu_custom_call.1} parent=1 // pred_region
      %s26 = ssub.s32 1024, 1024
      %27 = vsyncadd [#allocation7], %s26
      %s28 = sshll.u32 [#allocation6], 4
      %s29 = int_to_ptr.vmem [resolvable:$true] %s28
      %34 = dma.hbm_to_vmem [thread:$0]  %s1, 1024, %s29, [#allocation7], 64, 64, 4
    $region9: #{tpu_custom_call.1} parent=1 // pred_fallthru
      _
    // Predicated region
    $region10: #{tpu_custom_call.1} parent=1 // pred_check
      _
    $region11: #{tpu_custom_call.1} parent=1 // pred_check_branch
      %36 = sbr.rel (0) target = $region13
    $region12: #{tpu_custom_call.1} parent=1 // pred_region
      _
    $region13: #{tpu_custom_call.1} parent=1 // pred_fallthru
      _
    // Predicated region
    $region14: #{tpu_custom_call.1} parent=1 // pred_check
      _
    $region15: #{tpu_custom_call.1} parent=1 // pred_check_branch
      %38 = sbr.rel (0) target = $region17
    $region16: #{tpu_custom_call.1} parent=1 // pred_region
      %39 = dma.done [#allocation4], 256
    $region17: #{tpu_custom_call.1} parent=1 // pred_fallthru
      _
    // Predicated region
    $region18: #{tpu_custom_call.1} parent=1 // pred_check
      _
    $region19: #{tpu_custom_call.1} parent=1 // pred_check_branch
      %41 = sbr.rel (0) target = $region21
    $region20: #{tpu_custom_call.1} parent=1 // pred_region
      %42 = dma.done [#allocation7], 1024
    $region21: #{tpu_custom_call.1} parent=1 // pred_fallthru
      _
    %p44 = scmp.eq.s32.totalorder 0, 0
    // Predicated region
    $region22: #{tpu_custom_call.1} parent=1 // pred_check
      %p45 = pneg %p44
    $region23: #{tpu_custom_call.1} parent=1 // pred_check_branch
      %47 = sbr.rel (%p45) target = $region25
    $region24: #{tpu_custom_call.1} parent=1 // pred_region
      %v48 = vld [vmem:[#allocation3] sm:$0xff]
      %v49 = vld [vmem:[#allocation3 + $0x8] sm:$0xff]
      %50 = vadd.xlane.f32.xlu0 %v48
      %v51 = vpop.xlane.xlu0 %50
      %52 = vadd.xlane.f32.xlu0 %v49
      %v53 = vpop.xlane.xlu0 %52
      %v54 = vmul.f32 %v48, %v48
      %v55 = vmul.f32 %v49, %v49
      %56 = vadd.xlane.f32.xlu0 %v54
      %v57 = vpop.xlane.xlu0 %56
      %58 = vadd.xlane.f32.xlu0 %v55
      %v59 = vpop.xlane.xlu0 %58
      %v60 = vmul.f32 %v51, 0.0078125
      %v61 = vmul.f32 %v53, 0.0078125
      %v62 = vmul.f32 %v60, %v60
      %v63 = vmul.f32 %v61, %v61
      %v64 = vmul.f32 %v62, 128.0
      %v65 = vmul.f32 %v63, 128.0
      %v66 = vsub.f32 %v57, %v64
      %v67 = vsub.f32 %v59, %v65
      %v68 = vmul.f32 %v66, 0.007874016
      %v69 = vmul.f32 %v67, 0.007874016
      %v70 = vmax.f32 %v68, 0.0
      %v71 = vmax.f32 %v69, 0.0
      %v72 = vrsqrt.pop %v70
      %v73 = vmul.f32 %v70, %v72
      %vm74 = vcmp.eq.f32.partialorder %v70, inf
      %v75 = vsel %vm74, %v70, %v73
      %vm76 = vcmp.eq.f32.partialorder %v70, 0.0
      %v77 = vand.u32 %v70, 2147483648
      %v78 = vsel %vm76, %v77, %v75
      %v79 = vrsqrt.pop %v71
      %v80 = vmul.f32 %v71, %v79
      %vm81 = vcmp.eq.f32.partialorder %v71, inf
      %v82 = vsel %vm81, %v71, %v80
      %vm83 = vcmp.eq.f32.partialorder %v71, 0.0
      %v84 = vand.u32 %v71, 2147483648
      %v85 = vsel %vm83, %v84, %v82
      %v86 = vadd.f32 %v78, 1e-06
      %v87 = vadd.f32 %v85, 1e-06
      %v88 = vrcp.pop %v86
      %v89 = vrcp.pop %v87
      %v90 = vsub.f32 %v48, %v60
      %v91 = vsub.f32 %v49, %v61
      %v92 = vmul.f32 %v90, %v88
      %v93 = vmul.f32 %v91, %v89
      %v94 = vpack.c.bf16 %v93, %v92
      %95 = vst [vmem:[#allocation2] sm:$0xff] %v94
    $region25: #{tpu_custom_call.1} parent=1 // pred_fallthru
      _
    %v96 = vld [vmem:[#allocation2] sm:$0xff]
    %v97 = vld [vmem:[#allocation6] sm:$0xf]
    %v98 = vld [vmem:[#allocation6 + $0x4] sm:$0xf]
    %v99 = vld [vmem:[#allocation6 + $0x8] sm:$0xf]
    %v100 = vld [vmem:[#allocation6 + $0xc] sm:$0xf]
    %v101 = vld [vmem:[#allocation6 + $0x10] sm:$0xf]
    %v102 = vld [vmem:[#allocation6 + $0x14] sm:$0xf]
    %v103 = vld [vmem:[#allocation6 + $0x18] sm:$0xf]
    %v104 = vld [vmem:[#allocation6 + $0x1c] sm:$0xf]
    %v105 = vld [vmem:[#allocation6 + $0x20] sm:$0xf]
    %v106 = vld [vmem:[#allocation6 + $0x24] sm:$0xf]
    %v107 = vld [vmem:[#allocation6 + $0x28] sm:$0xf]
    %v108 = vld [vmem:[#allocation6 + $0x2c] sm:$0xf]
    %v109 = vld [vmem:[#allocation6 + $0x30] sm:$0xf]
    %v110 = vld [vmem:[#allocation6 + $0x34] sm:$0xf]
    %v111 = vld [vmem:[#allocation6 + $0x38] sm:$0xf]
    %v112 = vld [vmem:[#allocation6 + $0x3c] sm:$0xf]
    %v113 = vld [vmem:[%s2] sm:$0x1]
    %v115 = vlaneseq
    %v116 = vshrl.u32 %v115, 7
    %v117 = vsub.s32 0, %v116
    %v118 = vrot.slane %v113, %v117
    %v136 = vunpack.c.l.b16 %v97
    %v137 = vunpack.c.l.b16 %v98
    %v138 = vunpack.c.l.b16 %v99
    %v139 = vunpack.c.l.b16 %v100
    %v140 = vunpack.c.l.b16 %v101
    %v141 = vunpack.c.l.b16 %v102
    %v142 = vunpack.c.l.b16 %v103
    %v143 = vunpack.c.l.b16 %v104
    %v144 = vunpack.c.l.b16 %v105
    %v145 = vunpack.c.l.b16 %v106
    %v146 = vunpack.c.l.b16 %v107
    %v147 = vunpack.c.l.b16 %v108
    %v148 = vunpack.c.l.b16 %v109
    %v149 = vunpack.c.l.b16 %v110
    %v150 = vunpack.c.l.b16 %v111
    %v151 = vunpack.c.l.b16 %v112
    %v152 = vpack.c.b16 %v137, %v136
    %v153 = vpack.c.b16 %v139, %v138
    %v154 = vpack.c.b16 %v141, %v140
    %v155 = vpack.c.b16 %v143, %v142
    %v156 = vpack.c.b16 %v145, %v144
    %v157 = vpack.c.b16 %v147, %v146
    %v158 = vpack.c.b16 %v149, %v148
    %v159 = vpack.c.b16 %v151, %v150
    %168 = vmatprep.subr.bf16.mxu0 0
    %169 = vmatpush1.bf16.msra.mxu0 %v152
    %170 = vmatprep.subr.bf16.mxu0 0
    %171 = vmatpush1.bf16.msra.mxu0 %v153
    %172 = vmatprep.subr.bf16.mxu0 0
    %173 = vmatpush1.bf16.msra.mxu0 %v154
    %174 = vmatprep.subr.bf16.mxu0 0
    %175 = vmatpush1.bf16.msra.mxu0 %v155
    %176 = vmatprep.subr.bf16.mxu0 0
    %177 = vmatpush1.bf16.msra.mxu0 %v156
    %178 = vmatprep.subr.bf16.mxu0 0
    %179 = vmatpush1.bf16.msra.mxu0 %v157
    %180 = vmatprep.subr.bf16.mxu0 0
    %181 = vmatpush1.bf16.msra.mxu0 %v158
    %182 = vmatprep.subr.bf16.mxu0 0
    %183 = vmatpush1.bf16.msra.mxu0 %v159
    %184 = vmatprep.subr.bf16.mxu0 0
    %185 = vmatpush1.bf16.msra.mxu0 0
    %186 = vmatprep.subr.bf16.mxu0 0
    %187 = vmatpush1.bf16.msra.mxu0 0
    %188 = vmatprep.subr.bf16.mxu0 0
    %189 = vmatpush1.bf16.msra.mxu0 0
    %190 = vmatprep.subr.bf16.mxu0 0
    %191 = vmatpush1.bf16.msra.mxu0 0
    %192 = vmatprep.subr.bf16.mxu0 0
    %193 = vmatpush1.bf16.msra.mxu0 0
    %194 = vmatprep.subr.bf16.mxu0 0
    %195 = vmatpush1.bf16.msra.mxu0 0
    %196 = vmatprep.subr.bf16.mxu0 0
    %197 = vmatpush1.bf16.msra.mxu0 0
    %198 = vmatprep.subr.bf16.mxu0 0
    %199 = vmatpush1.bf16.msra.mxu0 0
    %200 = vmatprep.mubr.bf16.mxu0 0
    %201 = vmatmul.mubr.bf16.gmra.mrb[0].mxu0 %v96
    %v202 = vpop.f32.mrb[0].mxu0
    %v203 = vadd.f32 %v118, %v202
    %v204 = vpop.f32.mrb[0].mxu0
    %v205 = vpop.f32.mrb[0].mxu0
    %v206 = vadd.f32 %v118, %v205
    %v207 = vpop.f32.mrb[0].mxu0
    %208 = vdwg.mxu0
    %v209 = vld [vmem:[#allocation3] sm:$0xff]
    %v210 = vld [vmem:[#allocation3 + $0x8] sm:$0xff]
    %v211 = vadd.f32 %v209, %v203
    %v212 = vadd.f32 %v210, %v206
    %213 = vst [vmem:[#allocation8] sm:$0xff] %v211
    %214 = vst [vmem:[#allocation8 + $0x8] sm:$0xff] %v212
    // Predicated region
    $region26: #{tpu_custom_call.1} parent=1 // pred_check
      _
    $region27: #{tpu_custom_call.1} parent=1 // pred_check_branch
      %216 = sbr.rel (0) target = $region29
    $region28: #{tpu_custom_call.1} parent=1 // pred_region
      %s218 = ssub.s32 256, 256
      %219 = vsyncadd [#allocation5], %s218
      %s220 = sshll.u32 [#allocation8], 4
      %s221 = int_to_ptr.vmem [resolvable:$true] %s220
      %226 = dma.vmem_to_hbm [thread:$0]  %s221, 256, %s3, [#allocation5], 128, 128, 8
    $region29: #{tpu_custom_call.1} parent=1 // pred_fallthru
      _
    // Predicated region
    $region30: #{tpu_custom_call.1} parent=1 // pred_check
      _
    $region31: #{tpu_custom_call.1} parent=1 // pred_check_branch
      %228 = sbr.rel (0) target = $region33
    $region32: #{tpu_custom_call.1} parent=1 // pred_region
      %229 = dma.done [#allocation5], 256
    $region33: #{tpu_custom_call.1} parent=1 // pred_fallthru
      _
    %230 = vsyncpa [#allocation4], 1
    %231 = vsyncpa [#allocation7], 1
    %232 = vsyncpa [#allocation5], 1

</llo_original>
